<compile_context>
chip_gen: v7x
topology: tpu7x:2x2x1
jax: 0.10.0
libtpu: 0.0.40
codegen_flags: <defaults>
</compile_context>

<pallas_src>
import jax
import jax.numpy as jnp
from jax.experimental import pallas as pl
from jax.experimental.pallas import tpu as pltpu


def _round_up(x, m):
    return (x + m - 1) // m * m


def rnn_fc_kernel(x_ref, wih_ref, whh_ref, b_ref, wfc_ref, bfc_ref, out_ref):
    """Fused forward.

    x_ref:   (T*Bp, E) bf16 time-major flattened embeddings (2D -> zero-copy
             static per-step slices).
    wih_ref: (E, H)  bf16   W_ih^T
    whh_ref: (H, H)  bf16   W_hh^T
    b_ref:   (1, H)  f32    b_ih + b_hh (pre-summed in wrapper)
    wfc_ref: (H, Vp) bf16   W_fc^T (lane-padded vocab)
    bfc_ref: (1, Vp) f32
    out_ref: (Bp, Vp) f32
    """
    Bp = out_ref.shape[0]
    T = x_ref.shape[0] // Bp

    # Pre-stage loop-invariant MXU operands up front so their VMEM loads / RHS
    # setup are hidden under the serial recurrence; in particular the FC weight
    # is ready the moment h_T is produced (removes it from the kernel tail).
    whh = whh_ref[...]
    wfc = wfc_ref[...]
    bfc = bfc_ref[...]

    # Hoisted, time-independent input projection: ONE (T*Bp, E) x (E, H) bf16
    # matmul with f32 accumulation + f32 bias broadcast (done once).
    x2h = (jnp.dot(x_ref[...], wih_ref[...],
                   preferred_element_type=jnp.float32) + b_ref[...])

    # Recurrence: h carried in f32 vregs; only the MXU operands are cast to
    # bf16 each step; tanh / adds stay f32. Loop fully unrolled (T static,
    # small) so the LLO scheduler sees across iterations.
    # TODO(synk): for large T, tile T on an "arbitrary" grid axis with a VMEM
    #   scratch h (pl.when init/finalize) instead of keeping all of x2h live
    #   across an unrolled loop (vreg-file / VMEM scaling guard).
    # TODO(synk): hold W_hh in MXU weight registers across the loop via
    #   pltpu.matmul_push_rhs / matmul_acc_lhs / matmul_pop once a bundle dump
    #   confirms Mosaic re-pushes the (small) RHS every step.
    h = jnp.tanh(x2h[0:Bp, :])                       # h_0 = 0 -> no h @ Whh term
    for t in range(1, T):
        hr = jnp.dot(h.astype(jnp.bfloat16), whh,
                     preferred_element_type=jnp.float32)
        h = jnp.tanh(x2h[t * Bp:(t + 1) * Bp, :] + hr)

    # Final FC on h_T; (Bp, Vp) is (8, 128)-aligned -> unmasked lane-dense vst.
    out_ref[...] = (jnp.dot(h.astype(jnp.bfloat16), wfc,
                            preferred_element_type=jnp.float32)
                    + bfc).astype(out_ref.dtype)


def simple_rnn_forward(tokens, emb_table, w_ih_t, w_hh_t, b_ih, b_hh,
                       w_fc_t, b_fc):
    B, T = tokens.shape
    E = emb_table.shape[1]
    H = w_hh_t.shape[0]
    V = w_fc_t.shape[1]

    # Sublane-pad batch to 8, lane-pad vocab to 128 (unmasked output store).
    Bp = max(8, _round_up(B, 8))
    Vp = max(128, _round_up(V, 128))

    # Padded batch rows reuse token id 0: harmless (in-range, sliced off below);
    # never pad with an out-of-range id.
    tokens_p = jnp.pad(tokens, ((0, Bp - B), (0, 0)))

    # Embedding gather stays in the wrapper at these toy shapes.
    # TODO(synk): at realistic V/E/T, fuse the gather into the kernel via
    #   PrefetchScalarGridSpec(num_scalar_prefetch=1) + a pl.Element row
    #   index_map (or a manual DMA gather) to remove the (T,B,E) HBM round trip.
    x = (jnp.take(emb_table, tokens_p.T, axis=0)       # (T, Bp, E) time-major
         .reshape(T * Bp, E)                           # 2D: zero-copy kernel slices
         .astype(jnp.bfloat16))                        # bf16 MXU operand / half bytes

    b = (b_ih + b_hh).astype(jnp.float32)                                  # (1, H)
    w_fc_p = jnp.pad(w_fc_t, ((0, 0), (0, Vp - V))).astype(jnp.bfloat16)   # (H, Vp)
    b_fc_p = jnp.pad(b_fc, ((0, 0), (0, Vp - V))).astype(jnp.float32)      # (1, Vp)

    # TODO(synk): at realistic sizes add a "parallel" batch-tile grid axis
    #   (keeps both v7x TensorCores busy), tile T on an "arbitrary" axis so x
    #   streams/double-buffers instead of being fully resident, fill the MXU M
    #   dimension with 128/256-row batch tiles (v5e/v6e), and set
    #   vmem_limit_bytes for v7x's 64 MiB VMEM. At (B=2,T=8,H=32) a single
    #   program is latency/overhead bound and this is unnecessary.
    out_p = pl.pallas_call(
        rnn_fc_kernel,
        out_shape=jax.ShapeDtypeStruct((Bp, Vp), jnp.float32),
        grid=(1,),
        in_specs=[
            pl.BlockSpec((T * Bp, E), lambda i: (0, 0)),
            pl.BlockSpec((E, H), lambda i: (0, 0)),
            pl.BlockSpec((H, H), lambda i: (0, 0)),
            pl.BlockSpec((1, H), lambda i: (0, 0)),
            pl.BlockSpec((H, Vp), lambda i: (0, 0)),
            pl.BlockSpec((1, Vp), lambda i: (0, 0)),
        ],
        out_specs=pl.BlockSpec((Bp, Vp), lambda i: (0, 0)),
        compiler_params=pltpu.CompilerParams(
            dimension_semantics=("arbitrary",)),
    )(x, w_ih_t.astype(jnp.bfloat16), w_hh_t.astype(jnp.bfloat16), b,
      w_fc_p, b_fc_p)

    return out_p[:B, :V]


def reference_forward(tokens, emb_table, w_ih_t, w_hh_t, b_ih, b_hh,
                      w_fc_t, b_fc):
    # Pure-JAX f32 reference mirroring PyTorch semantics, for correctness check.
    x = jnp.take(emb_table, tokens, axis=0)        # (B, T, E)
    B, T, _ = x.shape
    H = w_hh_t.shape[0]
    h = jnp.zeros((B, H), jnp.float32)
    for t in range(T):
        h = jnp.tanh(x[:, t, :] @ w_ih_t + h @ w_hh_t + b_ih + b_hh)
    return h @ w_fc_t + b_fc


if __name__ == "__main__":
    # Small shapes implied by the module: token ids (B, T), hidden/embed dims.
    no_of_tokens = 64   # V
    embed_dim = 32      # E
    hid_size = 32       # H
    batch = 2           # B
    seq = 8             # T

    key = jax.random.PRNGKey(0)
    k_tok, k_emb, k_wih, k_whh, k_bih, k_bhh, k_wfc, k_bfc = jax.random.split(key, 8)

    tokens = jax.random.randint(k_tok, (batch, seq), 0, no_of_tokens, dtype=jnp.int32)

    # Deterministic parameter init (shapes match nn.Embedding / nn.RNN / nn.Linear).
    emb_table = jax.random.normal(k_emb, (no_of_tokens, embed_dim), jnp.float32)
    bound = 1.0 / jnp.sqrt(hid_size)
    w_ih_t = jax.random.uniform(k_wih, (embed_dim, hid_size), jnp.float32, -bound, bound)   # W_ih^T
    w_hh_t = jax.random.uniform(k_whh, (hid_size, hid_size), jnp.float32, -bound, bound)    # W_hh^T
    b_ih = jax.random.uniform(k_bih, (1, hid_size), jnp.float32, -bound, bound)
    b_hh = jax.random.uniform(k_bhh, (1, hid_size), jnp.float32, -bound, bound)
    w_fc_t = jax.random.uniform(k_wfc, (hid_size, no_of_tokens), jnp.float32, -bound, bound)  # W_fc^T
    b_fc = jax.random.uniform(k_bfc, (1, no_of_tokens), jnp.float32, -bound, bound)

    out = simple_rnn_forward(tokens, emb_table, w_ih_t, w_hh_t, b_ih, b_hh,
                             w_fc_t, b_fc)
    out = jax.block_until_ready(out)

    ref = reference_forward(tokens, emb_table, w_ih_t, w_hh_t, b_ih, b_hh,
                            w_fc_t, b_fc)
    assert out.shape == (batch, no_of_tokens)
    # Tolerance sized for bf16 MXU operands (f32 accumulation/tanh bounds drift).
    assert jnp.allclose(out, ref, atol=5e-2, rtol=5e-2)

    print("KERNEL_OK")
</pallas_src>

<mosaic_0001>
module attributes {stable_mosaic.version = 11 : i64} {
  func.func @rnn_fc_kernel(%arg0: i32, %arg1: memref<64x32xbf16, #tpu.memory_space<vmem>>, %arg2: memref<32x32xbf16, #tpu.memory_space<vmem>>, %arg3: memref<32x32xbf16, #tpu.memory_space<vmem>>, %arg4: memref<1x32xf32, #tpu.memory_space<vmem>>, %arg5: memref<32x128xbf16, #tpu.memory_space<vmem>>, %arg6: memref<1x128xf32, #tpu.memory_space<vmem>>, %arg7: memref<8x128xf32, #tpu.memory_space<vmem>>) attributes {dimension_semantics = [#tpu.dimension_semantics<arbitrary>], iteration_bounds = array<i64: 1>, scalar_prefetch = 0 : i64, scratch_operands = 0 : i64, tpu.core_type = #tpu.core_type<tc>, window_params = [{pipeline_mode = #tpu.pipeline_mode<synchronous>, transform_indices = @transform_0, window_bounds = array<i64: 64, 32>}, {pipeline_mode = #tpu.pipeline_mode<synchronous>, transform_indices = @transform_1, window_bounds = array<i64: 32, 32>}, {pipeline_mode = #tpu.pipeline_mode<synchronous>, transform_indices = @transform_2, window_bounds = array<i64: 32, 32>}, {pipeline_mode = #tpu.pipeline_mode<synchronous>, transform_indices = @transform_3, window_bounds = array<i64: 1, 32>}, {pipeline_mode = #tpu.pipeline_mode<synchronous>, transform_indices = @transform_4, window_bounds = array<i64: 32, 128>}, {pipeline_mode = #tpu.pipeline_mode<synchronous>, transform_indices = @transform_5, window_bounds = array<i64: 1, 128>}, {pipeline_mode = #tpu.pipeline_mode<synchronous>, transform_indices = @transform_6, window_bounds = array<i64: 8, 128>}]} {
    %c0 = arith.constant 0 : index
    %c0_0 = arith.constant 0 : index
    %0 = vector.load %arg3[%c0, %c0_0] : memref<32x32xbf16, #tpu.memory_space<vmem>>, vector<32x32xbf16>
    %c0_1 = arith.constant 0 : index
    %c0_2 = arith.constant 0 : index
    %1 = vector.load %arg5[%c0_1, %c0_2] : memref<32x128xbf16, #tpu.memory_space<vmem>>, vector<32x128xbf16>
    %c0_3 = arith.constant 0 : index
    %c0_4 = arith.constant 0 : index
    %2 = vector.load %arg6[%c0_3, %c0_4] : memref<1x128xf32, #tpu.memory_space<vmem>>, vector<1x128xf32>
    %c0_5 = arith.constant 0 : index
    %c0_6 = arith.constant 0 : index
    %3 = vector.load %arg1[%c0_5, %c0_6] : memref<64x32xbf16, #tpu.memory_space<vmem>>, vector<64x32xbf16>
    %c0_7 = arith.constant 0 : index
    %c0_8 = arith.constant 0 : index
    %4 = vector.load %arg2[%c0_7, %c0_8] : memref<32x32xbf16, #tpu.memory_space<vmem>>, vector<32x32xbf16>
    %cst = arith.constant dense<0.000000e+00> : vector<64x32xf32>
    %5 = tpu.matmul %3, %4, %cst {dimension_numbers = #tpu.dot_dimension_numbers<[1], [0], [0], [1], [0, 0, 1, 1], [], []>} : vector<64x32xbf16>, vector<32x32xbf16>, vector<64x32xf32> -> vector<64x32xf32>
    %c0_9 = arith.constant 0 : index
    %c0_10 = arith.constant 0 : index
    %6 = vector.load %arg4[%c0_9, %c0_10] : memref<1x32xf32, #tpu.memory_space<vmem>>, vector<1x32xf32>
    %7 = vector.broadcast %6 : vector<1x32xf32> to vector<64x32xf32>
    %8 = arith.addf %5, %7 : vector<64x32xf32>
    %9 = vector.extract_strided_slice %8 {offsets = [0, 0], sizes = [8, 32], strides = [1, 1]} : vector<64x32xf32> to vector<8x32xf32>
    %10 = math.tanh %9 : vector<8x32xf32>
    %11 = arith.truncf %10 : vector<8x32xf32> to vector<8x32xbf16>
    %cst_11 = arith.constant dense<0.000000e+00> : vector<8x32xf32>
    %12 = tpu.matmul %11, %0, %cst_11 {dimension_numbers = #tpu.dot_dimension_numbers<[1], [0], [0], [1], [0, 0, 1, 1], [], []>} : vector<8x32xbf16>, vector<32x32xbf16>, vector<8x32xf32> -> vector<8x32xf32>
    %13 = vector.extract_strided_slice %8 {offsets = [8, 0], sizes = [8, 32], strides = [1, 1]} : vector<64x32xf32> to vector<8x32xf32>
    %14 = arith.addf %13, %12 : vector<8x32xf32>
    %15 = math.tanh %14 : vector<8x32xf32>
    %16 = arith.truncf %15 : vector<8x32xf32> to vector<8x32xbf16>
    %cst_12 = arith.constant dense<0.000000e+00> : vector<8x32xf32>
    %17 = tpu.matmul %16, %0, %cst_12 {dimension_numbers = #tpu.dot_dimension_numbers<[1], [0], [0], [1], [0, 0, 1, 1], [], []>} : vector<8x32xbf16>, vector<32x32xbf16>, vector<8x32xf32> -> vector<8x32xf32>
    %18 = vector.extract_strided_slice %8 {offsets = [16, 0], sizes = [8, 32], strides = [1, 1]} : vector<64x32xf32> to vector<8x32xf32>
    %19 = arith.addf %18, %17 : vector<8x32xf32>
    %20 = math.tanh %19 : vector<8x32xf32>
    %21 = arith.truncf %20 : vector<8x32xf32> to vector<8x32xbf16>
    %cst_13 = arith.constant dense<0.000000e+00> : vector<8x32xf32>
    %22 = tpu.matmul %21, %0, %cst_13 {dimension_numbers = #tpu.dot_dimension_numbers<[1], [0], [0], [1], [0, 0, 1, 1], [], []>} : vector<8x32xbf16>, vector<32x32xbf16>, vector<8x32xf32> -> vector<8x32xf32>
    %23 = vector.extract_strided_slice %8 {offsets = [24, 0], sizes = [8, 32], strides = [1, 1]} : vector<64x32xf32> to vector<8x32xf32>
    %24 = arith.addf %23, %22 : vector<8x32xf32>
    %25 = math.tanh %24 : vector<8x32xf32>
    %26 = arith.truncf %25 : vector<8x32xf32> to vector<8x32xbf16>
    %cst_14 = arith.constant dense<0.000000e+00> : vector<8x32xf32>
    %27 = tpu.matmul %26, %0, %cst_14 {dimension_numbers = #tpu.dot_dimension_numbers<[1], [0], [0], [1], [0, 0, 1, 1], [], []>} : vector<8x32xbf16>, vector<32x32xbf16>, vector<8x32xf32> -> vector<8x32xf32>
    %28 = vector.extract_strided_slice %8 {offsets = [32, 0], sizes = [8, 32], strides = [1, 1]} : vector<64x32xf32> to vector<8x32xf32>
    %29 = arith.addf %28, %27 : vector<8x32xf32>
    %30 = math.tanh %29 : vector<8x32xf32>
    %31 = arith.truncf %30 : vector<8x32xf32> to vector<8x32xbf16>
    %cst_15 = arith.constant dense<0.000000e+00> : vector<8x32xf32>
    %32 = tpu.matmul %31, %0, %cst_15 {dimension_numbers = #tpu.dot_dimension_numbers<[1], [0], [0], [1], [0, 0, 1, 1], [], []>} : vector<8x32xbf16>, vector<32x32xbf16>, vector<8x32xf32> -> vector<8x32xf32>
    %33 = vector.extract_strided_slice %8 {offsets = [40, 0], sizes = [8, 32], strides = [1, 1]} : vector<64x32xf32> to vector<8x32xf32>
    %34 = arith.addf %33, %32 : vector<8x32xf32>
    %35 = math.tanh %34 : vector<8x32xf32>
    %36 = arith.truncf %35 : vector<8x32xf32> to vector<8x32xbf16>
    %cst_16 = arith.constant dense<0.000000e+00> : vector<8x32xf32>
    %37 = tpu.matmul %36, %0, %cst_16 {dimension_numbers = #tpu.dot_dimension_numbers<[1], [0], [0], [1], [0, 0, 1, 1], [], []>} : vector<8x32xbf16>, vector<32x32xbf16>, vector<8x32xf32> -> vector<8x32xf32>
    %38 = vector.extract_strided_slice %8 {offsets = [48, 0], sizes = [8, 32], strides = [1, 1]} : vector<64x32xf32> to vector<8x32xf32>
    %39 = arith.addf %38, %37 : vector<8x32xf32>
    %40 = math.tanh %39 : vector<8x32xf32>
    %41 = arith.truncf %40 : vector<8x32xf32> to vector<8x32xbf16>
    %cst_17 = arith.constant dense<0.000000e+00> : vector<8x32xf32>
    %42 = tpu.matmul %41, %0, %cst_17 {dimension_numbers = #tpu.dot_dimension_numbers<[1], [0], [0], [1], [0, 0, 1, 1], [], []>} : vector<8x32xbf16>, vector<32x32xbf16>, vector<8x32xf32> -> vector<8x32xf32>
    %43 = vector.extract_strided_slice %8 {offsets = [56, 0], sizes = [8, 32], strides = [1, 1]} : vector<64x32xf32> to vector<8x32xf32>
    %44 = arith.addf %43, %42 : vector<8x32xf32>
    %45 = math.tanh %44 : vector<8x32xf32>
    %46 = arith.truncf %45 : vector<8x32xf32> to vector<8x32xbf16>
    %cst_18 = arith.constant dense<0.000000e+00> : vector<8x128xf32>
    %47 = tpu.matmul %46, %1, %cst_18 {dimension_numbers = #tpu.dot_dimension_numbers<[1], [0], [0], [1], [0, 0, 1, 1], [], []>} : vector<8x32xbf16>, vector<32x128xbf16>, vector<8x128xf32> -> vector<8x128xf32>
    %48 = vector.broadcast %2 : vector<1x128xf32> to vector<8x128xf32>
    %49 = arith.addf %47, %48 : vector<8x128xf32>
    %c0_19 = arith.constant 0 : index
    %c0_20 = arith.constant 0 : index
    %50 = vector.load %arg7[%c0_19, %c0_20] : memref<8x128xf32, #tpu.memory_space<vmem>>, vector<8x128xf32>
    tpu.vector_store %arg7[%c0_19, %c0_20], %49 {strides = array<i32>} : memref<8x128xf32, #tpu.memory_space<vmem>>, vector<8x128xf32>,
    return
  }
  func.func @transform_0(%arg0: i32) -> (i32, i32) {
    %c0_i32 = arith.constant 0 : i32
    %c0_i32_0 = arith.constant 0 : i32
    %c0_i32_1 = arith.constant 0 : i32
    return %c0_i32, %c0_i32_0 : i32, i32
  }
  func.func @transform_1(%arg0: i32) -> (i32, i32) {
    %c0_i32 = arith.constant 0 : i32
    %c0_i32_0 = arith.constant 0 : i32
    %c0_i32_1 = arith.constant 0 : i32
    return %c0_i32, %c0_i32_0 : i32, i32
  }
  func.func @transform_2(%arg0: i32) -> (i32, i32) {
    %c0_i32 = arith.constant 0 : i32
    %c0_i32_0 = arith.constant 0 : i32
    %c0_i32_1 = arith.constant 0 : i32
    return %c0_i32, %c0_i32_0 : i32, i32
  }
  func.func @transform_3(%arg0: i32) -> (i32, i32) {
    %c0_i32 = arith.constant 0 : i32
    %c0_i32_0 = arith.constant 0 : i32
    %c0_i32_1 = arith.constant 0 : i32
    return %c0_i32, %c0_i32_0 : i32, i32
  }
  func.func @transform_4(%arg0: i32) -> (i32, i32) {
    %c0_i32 = arith.constant 0 : i32
    %c0_i32_0 = arith.constant 0 : i32
    %c0_i32_1 = arith.constant 0 : i32
    return %c0_i32, %c0_i32_0 : i32, i32
  }
  func.func @transform_5(%arg0: i32) -> (i32, i32) {
    %c0_i32 = arith.constant 0 : i32
    %c0_i32_0 = arith.constant 0 : i32
    %c0_i32_1 = arith.constant 0 : i32
    return %c0_i32, %c0_i32_0 : i32, i32
  }
  func.func @transform_6(%arg0: i32) -> (i32, i32) {
    %c0_i32 = arith.constant 0 : i32
    %c0_i32_0 = arith.constant 0 : i32
    %c0_i32_1 = arith.constant 0 : i32
    return %c0_i32, %c0_i32_0 : i32, i32
  }
}

</mosaic_0001>

<llo_original>
// kernel: tpu_custom_call.1
$region0: #{tpu_custom_call.1}
  #allocation0 [shape = 'u32[]', space=smem, size = 0x4, offset = 0x4, fixed_abs, tag = 'smem constant byte address 0x4 - core index']
  #allocation1 [shape = 'u32[144,128]{1,0:T(1,128)}', space=vmem, size = 0x12000, scoped, tag = 'internal scratch']
  %s0 = inlined_call_operand.vmem [shape: bf16[64,32], index: 0, kind: input, shape index: {}]
  %s1 = inlined_call_operand.vmem [shape: bf16[32,32], index: 1, kind: input, shape index: {}]
  %s2 = inlined_call_operand.vmem [shape: bf16[32,32], index: 2, kind: input, shape index: {}]
  %s3 = inlined_call_operand.vmem [shape: f32[1,32], index: 3, kind: input, shape index: {}]
  %s4 = inlined_call_operand.vmem [shape: bf16[32,128], index: 4, kind: input, shape index: {}]
  %s5 = inlined_call_operand.vmem [shape: f32[1,128], index: 5, kind: input, shape index: {}]
  %s6 = inlined_call_operand.hbm [shape: f32[8,128], index: 6, kind: output, shape index: {}]
  %s7 = sld [smem:[#allocation0]]
  $region34: #{tpu_custom_call.1} parent=0
    _
  %s9 = ssub.s32 1, %s7
  %s10 = scalar_select 0, %s9, %s7
  $region1: #{tpu_custom_call.1} parent=0
    #allocation2 [shape = 'u8[4096]{0}', space=vmem, size = 0x1000, scoped, tag = 'output window, operand 0, single buffered']
    #allocation3 [shape = 's32[1]{0}', space=sflag, size = 0x4, scoped, tag = 'scoped memory for tpu_custom_call.1']
    %11 = vsyncpa [#allocation3], 0
    // Predicated region
    $region2: #{tpu_custom_call.1} parent=1 // pred_check
      _
    $region3: #{tpu_custom_call.1} parent=1 // pred_check_branch
      %13 = sbr.rel (0) target = $region5
    $region4: #{tpu_custom_call.1} parent=1 // pred_region
      _
    $region5: #{tpu_custom_call.1} parent=1 // pred_fallthru
      _
    // Predicated region
    $region6: #{tpu_custom_call.1} parent=1 // pred_check
      _
    $region7: #{tpu_custom_call.1} parent=1 // pred_check_branch
      %15 = sbr.rel (0) target = $region9
    $region8: #{tpu_custom_call.1} parent=1 // pred_region
      _
    $region9: #{tpu_custom_call.1} parent=1 // pred_fallthru
      _
    // Predicated region
    $region10: #{tpu_custom_call.1} parent=1 // pred_check
      _
    $region11: #{tpu_custom_call.1} parent=1 // pred_check_branch
      %17 = sbr.rel (0) target = $region13
    $region12: #{tpu_custom_call.1} parent=1 // pred_region
      _
    $region13: #{tpu_custom_call.1} parent=1 // pred_fallthru
      _
    // Predicated region
    $region14: #{tpu_custom_call.1} parent=1 // pred_check
      _
    $region15: #{tpu_custom_call.1} parent=1 // pred_check_branch
      %19 = sbr.rel (0) target = $region17
    $region16: #{tpu_custom_call.1} parent=1 // pred_region
      _
    $region17: #{tpu_custom_call.1} parent=1 // pred_fallthru
      _
    // Predicated region
    $region18: #{tpu_custom_call.1} parent=1 // pred_check
      _
    $region19: #{tpu_custom_call.1} parent=1 // pred_check_branch
      %21 = sbr.rel (0) target = $region21
    $region20: #{tpu_custom_call.1} parent=1 // pred_region
      _
    $region21: #{tpu_custom_call.1} parent=1 // pred_fallthru
      _
    // Predicated region
    $region22: #{tpu_custom_call.1} parent=1 // pred_check
      _
    $region23: #{tpu_custom_call.1} parent=1 // pred_check_branch
      %23 = sbr.rel (0) target = $region25
    $region24: #{tpu_custom_call.1} parent=1 // pred_region
      _
    $region25: #{tpu_custom_call.1} parent=1 // pred_fallthru
      _
    %v25 = vld [vmem:[%s2] sm:$0xf]
    %v26 = vld [vmem:[%s2 + $0x4] sm:$0xf]
    %v27 = vld [vmem:[%s2 + $0x8] sm:$0xf]
    %v28 = vld [vmem:[%s2 + $0xc] sm:$0xf]
    %v29 = vld [vmem:[%s4] sm:$0xf]
    %v30 = vld [vmem:[%s4 + $0x4] sm:$0xf]
    %v31 = vld [vmem:[%s4 + $0x8] sm:$0xf]
    %v32 = vld [vmem:[%s4 + $0xc] sm:$0xf]
    %v33 = vld [vmem:[%s5] sm:$0x1]
    %v34 = vld [vmem:[%s0] sm:$0xf]
    %v35 = vld [vmem:[%s0 + $0x4] sm:$0xf]
    %v36 = vld [vmem:[%s0 + $0x8] sm:$0xf]
    %v37 = vld [vmem:[%s0 + $0xc] sm:$0xf]
    %v38 = vld [vmem:[%s0 + $0x10] sm:$0xf]
    %v39 = vld [vmem:[%s0 + $0x14] sm:$0xf]
    %v40 = vld [vmem:[%s0 + $0x18] sm:$0xf]
    %v41 = vld [vmem:[%s0 + $0x1c] sm:$0xf]
    %v42 = vld [vmem:[%s1] sm:$0xf]
    %v43 = vld [vmem:[%s1 + $0x4] sm:$0xf]
    %v44 = vld [vmem:[%s1 + $0x8] sm:$0xf]
    %v45 = vld [vmem:[%s1 + $0xc] sm:$0xf]
    %v46 = vld [vmem:[%s3] sm:$0x1]
    %v48 = vlaneseq
    %v49 = vshrl.u32 %v48, 7
    %v50 = vsub.s32 0, %v49
    %v51 = vrot.slane %v46, %v50
    %v61 = vunpack.c.l.b16 %v34
    %v62 = vunpack.c.l.b16 %v35
    %v63 = vunpack.c.l.b16 %v36
    %v64 = vunpack.c.l.b16 %v37
    %v65 = vunpack.c.l.b16 %v38
    %v66 = vunpack.c.l.b16 %v39
    %v67 = vunpack.c.l.b16 %v40
    %v68 = vunpack.c.l.b16 %v41
    %v69 = vpack.c.b16 %v62, %v61
    %v70 = vpack.c.b16 %v64, %v63
    %v71 = vpack.c.b16 %v66, %v65
    %v72 = vpack.c.b16 %v68, %v67
    %v77 = vunpack.c.l.b16 %v42
    %v78 = vunpack.c.l.b16 %v43
    %v79 = vunpack.c.l.b16 %v44
    %v80 = vunpack.c.l.b16 %v45
    %v81 = vpack.c.b16 %v78, %v77
    %v82 = vpack.c.b16 %v80, %v79
    %vm85 = vcmask 261120
    %v87 = vsel %vm85, %v69, 0
    %v90 = vsel %vm85, %v70, 0
    %v93 = vsel %vm85, %v71, 0
    %v96 = vsel %vm85, %v72, 0
    %98 = vmatprep.subr.bf16.mxu0 0
    %99 = vmatpush1.bf16.msra.mxu0 %v81
    %100 = vmatprep.subr.bf16.mxu0 0
    %101 = vmatpush1.bf16.msra.mxu0 %v82
    %102 = vmatprep.subr.bf16.mxu0 0
    %103 = vmatpush1.bf16.msra.mxu0 0
    %104 = vmatprep.subr.bf16.mxu0 0
    %105 = vmatpush1.bf16.msra.mxu0 0
    %106 = vmatprep.subr.bf16.mxu0 0
    %107 = vmatpush1.bf16.msra.mxu0 0
    %108 = vmatprep.subr.bf16.mxu0 0
    %109 = vmatpush1.bf16.msra.mxu0 0
    %110 = vmatprep.subr.bf16.mxu0 0
    %111 = vmatpush1.bf16.msra.mxu0 0
    %112 = vmatprep.subr.bf16.mxu0 0
    %113 = vmatpush1.bf16.msra.mxu0 0
    %114 = vmatprep.subr.bf16.mxu0 0
    %115 = vmatpush1.bf16.msra.mxu0 0
    %116 = vmatprep.subr.bf16.mxu0 0
    %117 = vmatpush1.bf16.msra.mxu0 0
    %118 = vmatprep.subr.bf16.mxu0 0
    %119 = vmatpush1.bf16.msra.mxu0 0
    %120 = vmatprep.subr.bf16.mxu0 0
    %121 = vmatpush1.bf16.msra.mxu0 0
    %122 = vmatprep.subr.bf16.mxu0 0
    %123 = vmatpush1.bf16.msra.mxu0 0
    %124 = vmatprep.subr.bf16.mxu0 0
    %125 = vmatpush1.bf16.msra.mxu0 0
    %126 = vmatprep.subr.bf16.mxu0 0
    %127 = vmatpush1.bf16.msra.mxu0 0
    %128 = vmatprep.subr.bf16.mxu0 0
    %129 = vmatpush1.bf16.msra.mxu0 0
    %130 = vmatprep.mubr.bf16.mxu0 0
    %131 = vmatmul.mubr.bf16.gmra.mrb[0].mxu0 %v87
    %v132 = vpop.f32.mrb[0].mxu0
    %v133 = vadd.f32 %v51, %v132
    %v134 = vpop.f32.mrb[0].mxu0
    %v135 = vpop.f32.mrb[0].mxu0
    %v136 = vadd.f32 %v51, %v135
    %v137 = vpop.f32.mrb[0].mxu0
    %138 = vmatprep.mubr.bf16.mxu0 0
    %139 = vmatmul.mubr.bf16.gmra.mrb[0].mxu0 %v90
    %v140 = vpop.f32.mrb[0].mxu0
    %v141 = vadd.f32 %v51, %v140
    %v142 = vpop.f32.mrb[0].mxu0
    %v143 = vpop.f32.mrb[0].mxu0
    %v144 = vadd.f32 %v51, %v143
    %v145 = vpop.f32.mrb[0].mxu0
    %146 = vmatprep.mubr.bf16.mxu0 0
    %147 = vmatmul.mubr.bf16.gmra.mrb[0].mxu0 %v93
    %v148 = vpop.f32.mrb[0].mxu0
    %v149 = vadd.f32 %v51, %v148
    %v150 = vpop.f32.mrb[0].mxu0
    %v151 = vpop.f32.mrb[0].mxu0
    %v152 = vadd.f32 %v51, %v151
    %v153 = vpop.f32.mrb[0].mxu0
    %154 = vmatprep.mubr.bf16.mxu0 0
    %155 = vmatmul.mubr.bf16.gmra.mrb[0].mxu0 %v96
    %v156 = vpop.f32.mrb[0].mxu0
    %v157 = vadd.f32 %v51, %v156
    %v158 = vpop.f32.mrb[0].mxu0
    %v159 = vpop.f32.mrb[0].mxu0
    %v160 = vadd.f32 %v51, %v159
    %v161 = vpop.f32.mrb[0].mxu0
    %162 = vdwg.mxu0
    %v163 = vtanh.pop %v133
    %v164 = vpack.c.bf16 %v163, %v163
    %v169 = vunpack.c.l.b16 %v25
    %v170 = vunpack.c.l.b16 %v26
    %v171 = vunpack.c.l.b16 %v27
    %v172 = vunpack.c.l.b16 %v28
    %v173 = vpack.c.b16 %v170, %v169
    %v174 = vpack.c.b16 %v172, %v171
    %v178 = vsel %vm85, %v164, 0
    %180 = vmatprep.subr.bf16.mxu0 0
    %181 = vmatpush1.bf16.msra.mxu0 %v173
    %182 = vmatprep.subr.bf16.mxu0 0
    %183 = vmatpush1.bf16.msra.mxu0 %v174
    %184 = vmatprep.subr.bf16.mxu0 0
    %185 = vmatpush1.bf16.msra.mxu0 0
    %186 = vmatprep.subr.bf16.mxu0 0
    %187 = vmatpush1.bf16.msra.mxu0 0
    %188 = vmatprep.subr.bf16.mxu0 0
    %189 = vmatpush1.bf16.msra.mxu0 0
    %190 = vmatprep.subr.bf16.mxu0 0
    %191 = vmatpush1.bf16.msra.mxu0 0
    %192 = vmatprep.subr.bf16.mxu0 0
    %193 = vmatpush1.bf16.msra.mxu0 0
    %194 = vmatprep.subr.bf16.mxu0 0
    %195 = vmatpush1.bf16.msra.mxu0 0
    %196 = vmatprep.subr.bf16.mxu0 0
    %197 = vmatpush1.bf16.msra.mxu0 0
    %198 = vmatprep.subr.bf16.mxu0 0
    %199 = vmatpush1.bf16.msra.mxu0 0
    %200 = vmatprep.subr.bf16.mxu0 0
    %201 = vmatpush1.bf16.msra.mxu0 0
    %202 = vmatprep.subr.bf16.mxu0 0
    %203 = vmatpush1.bf16.msra.mxu0 0
    %204 = vmatprep.subr.bf16.mxu0 0
    %205 = vmatpush1.bf16.msra.mxu0 0
    %206 = vmatprep.subr.bf16.mxu0 0
    %207 = vmatpush1.bf16.msra.mxu0 0
    %208 = vmatprep.subr.bf16.mxu0 0
    %209 = vmatpush1.bf16.msra.mxu0 0
    %210 = vmatprep.subr.bf16.mxu0 0
    %211 = vmatpush1.bf16.msra.mxu0 0
    %212 = vmatprep.mubr.bf16.mxu0 0
    %213 = vmatmul.mubr.bf16.gmra.mrb[0].mxu0 %v178
    %v214 = vpop.f32.mrb[0].mxu0
    %v215 = vadd.f32 0.0, %v214
    %v216 = vpop.f32.mrb[0].mxu0
    %v217 = vpop.f32.mrb[0].mxu0
    %v218 = vpop.f32.mrb[0].mxu0
    %219 = vdwg.mxu0
    %v220 = vadd.f32 %v136, %v215
    %v221 = vtanh.pop %v220
    %v222 = vpack.c.bf16 %v221, %v221
    %v224 = vsel %vm85, %v222, 0
    %226 = vmatprep.subr.bf16.mxu0 0
    %227 = vmatpush1.bf16.msra.mxu0 %v173
    %228 = vmatprep.subr.bf16.mxu0 0
    %229 = vmatpush1.bf16.msra.mxu0 %v174
    %230 = vmatprep.subr.bf16.mxu0 0
    %231 = vmatpush1.bf16.msra.mxu0 0
    %232 = vmatprep.subr.bf16.mxu0 0
    %233 = vmatpush1.bf16.msra.mxu0 0
    %234 = vmatprep.subr.bf16.mxu0 0
    %235 = vmatpush1.bf16.msra.mxu0 0
    %236 = vmatprep.subr.bf16.mxu0 0
    %237 = vmatpush1.bf16.msra.mxu0 0
    %238 = vmatprep.subr.bf16.mxu0 0
    %239 = vmatpush1.bf16.msra.mxu0 0
    %240 = vmatprep.subr.bf16.mxu0 0
    %241 = vmatpush1.bf16.msra.mxu0 0
    %242 = vmatprep.subr.bf16.mxu0 0
    %243 = vmatpush1.bf16.msra.mxu0 0
    %244 = vmatprep.subr.bf16.mxu0 0
    %245 = vmatpush1.bf16.msra.mxu0 0
    %246 = vmatprep.subr.bf16.mxu0 0
    %247 = vmatpush1.bf16.msra.mxu0 0
    %248 = vmatprep.subr.bf16.mxu0 0
    %249 = vmatpush1.bf16.msra.mxu0 0
    %250 = vmatprep.subr.bf16.mxu0 0
    %251 = vmatpush1.bf16.msra.mxu0 0
    %252 = vmatprep.subr.bf16.mxu0 0
    %253 = vmatpush1.bf16.msra.mxu0 0
    %254 = vmatprep.subr.bf16.mxu0 0
    %255 = vmatpush1.bf16.msra.mxu0 0
    %256 = vmatprep.subr.bf16.mxu0 0
    %257 = vmatpush1.bf16.msra.mxu0 0
    %258 = vmatprep.mubr.bf16.mxu0 0
    %259 = vmatmul.mubr.bf16.gmra.mrb[0].mxu0 %v224
    %v260 = vpop.f32.mrb[0].mxu0
    %v261 = vadd.f32 0.0, %v260
    %v262 = vpop.f32.mrb[0].mxu0
    %v263 = vpop.f32.mrb[0].mxu0
    %v264 = vpop.f32.mrb[0].mxu0
    %265 = vdwg.mxu0
    %v266 = vadd.f32 %v141, %v261
    %v267 = vtanh.pop %v266
    %v268 = vpack.c.bf16 %v267, %v267
    %v270 = vsel %vm85, %v268, 0
    %272 = vmatprep.subr.bf16.mxu0 0
    %273 = vmatpush1.bf16.msra.mxu0 %v173
    %274 = vmatprep.subr.bf16.mxu0 0
    %275 = vmatpush1.bf16.msra.mxu0 %v174
    %276 = vmatprep.subr.bf16.mxu0 0
    %277 = vmatpush1.bf16.msra.mxu0 0
    %278 = vmatprep.subr.bf16.mxu0 0
    %279 = vmatpush1.bf16.msra.mxu0 0
    %280 = vmatprep.subr.bf16.mxu0 0
    %281 = vmatpush1.bf16.msra.mxu0 0
    %282 = vmatprep.subr.bf16.mxu0 0
    %283 = vmatpush1.bf16.msra.mxu0 0
    %284 = vmatprep.subr.bf16.mxu0 0
    %285 = vmatpush1.bf16.msra.mxu0 0
    %286 = vmatprep.subr.bf16.mxu0 0
    %287 = vmatpush1.bf16.msra.mxu0 0
    %288 = vmatprep.subr.bf16.mxu0 0
    %289 = vmatpush1.bf16.msra.mxu0 0
    %290 = vmatprep.subr.bf16.mxu0 0
    %291 = vmatpush1.bf16.msra.mxu0 0
    %292 = vmatprep.subr.bf16.mxu0 0
    %293 = vmatpush1.bf16.msra.mxu0 0
    %294 = vmatprep.subr.bf16.mxu0 0
    %295 = vmatpush1.bf16.msra.mxu0 0
    %296 = vmatprep.subr.bf16.mxu0 0
    %297 = vmatpush1.bf16.msra.mxu0 0
    %298 = vmatprep.subr.bf16.mxu0 0
    %299 = vmatpush1.bf16.msra.mxu0 0
    %300 = vmatprep.subr.bf16.mxu0 0
    %301 = vmatpush1.bf16.msra.mxu0 0
    %302 = vmatprep.subr.bf16.mxu0 0
    %303 = vmatpush1.bf16.msra.mxu0 0
    %304 = vmatprep.mubr.bf16.mxu0 0
    %305 = vmatmul.mubr.bf16.gmra.mrb[0].mxu0 %v270
    %v306 = vpop.f32.mrb[0].mxu0
    %v307 = vadd.f32 0.0, %v306
    %v308 = vpop.f32.mrb[0].mxu0
    %v309 = vpop.f32.mrb[0].mxu0
    %v310 = vpop.f32.mrb[0].mxu0
    %311 = vdwg.mxu0
    %v312 = vadd.f32 %v144, %v307
    %v313 = vtanh.pop %v312
    %v314 = vpack.c.bf16 %v313, %v313
    %v316 = vsel %vm85, %v314, 0
    %318 = vmatprep.subr.bf16.mxu0 0
    %319 = vmatpush1.bf16.msra.mxu0 %v173
    %320 = vmatprep.subr.bf16.mxu0 0
    %321 = vmatpush1.bf16.msra.mxu0 %v174
    %322 = vmatprep.subr.bf16.mxu0 0
    %323 = vmatpush1.bf16.msra.mxu0 0
    %324 = vmatprep.subr.bf16.mxu0 0
    %325 = vmatpush1.bf16.msra.mxu0 0
    %326 = vmatprep.subr.bf16.mxu0 0
    %327 = vmatpush1.bf16.msra.mxu0 0
    %328 = vmatprep.subr.bf16.mxu0 0
    %329 = vmatpush1.bf16.msra.mxu0 0
    %330 = vmatprep.subr.bf16.mxu0 0
    %331 = vmatpush1.bf16.msra.mxu0 0
    %332 = vmatprep.subr.bf16.mxu0 0
    %333 = vmatpush1.bf16.msra.mxu0 0
    %334 = vmatprep.subr.bf16.mxu0 0
    %335 = vmatpush1.bf16.msra.mxu0 0
    %336 = vmatprep.subr.bf16.mxu0 0
    %337 = vmatpush1.bf16.msra.mxu0 0
    %338 = vmatprep.subr.bf16.mxu0 0
    %339 = vmatpush1.bf16.msra.mxu0 0
    %340 = vmatprep.subr.bf16.mxu0 0
    %341 = vmatpush1.bf16.msra.mxu0 0
    %342 = vmatprep.subr.bf16.mxu0 0
    %343 = vmatpush1.bf16.msra.mxu0 0
    %344 = vmatprep.subr.bf16.mxu0 0
    %345 = vmatpush1.bf16.msra.mxu0 0
    %346 = vmatprep.subr.bf16.mxu0 0
    %347 = vmatpush1.bf16.msra.mxu0 0
    %348 = vmatprep.subr.bf16.mxu0 0
    %349 = vmatpush1.bf16.msra.mxu0 0
    %350 = vmatprep.mubr.bf16.mxu0 0
    %351 = vmatmul.mubr.bf16.gmra.mrb[0].mxu0 %v316
    %v352 = vpop.f32.mrb[0].mxu0
    %v353 = vadd.f32 0.0, %v352
    %v354 = vpop.f32.mrb[0].mxu0
    %v355 = vpop.f32.mrb[0].mxu0
    %v356 = vpop.f32.mrb[0].mxu0
    %357 = vdwg.mxu0
    %v358 = vadd.f32 %v149, %v353
    %v359 = vtanh.pop %v358
    %v360 = vpack.c.bf16 %v359, %v359
    %v362 = vsel %vm85, %v360, 0
    %364 = vmatprep.subr.bf16.mxu0 0
    %365 = vmatpush1.bf16.msra.mxu0 %v173
    %366 = vmatprep.subr.bf16.mxu0 0
    %367 = vmatpush1.bf16.msra.mxu0 %v174
    %368 = vmatprep.subr.bf16.mxu0 0
    %369 = vmatpush1.bf16.msra.mxu0 0
    %370 = vmatprep.subr.bf16.mxu0 0
    %371 = vmatpush1.bf16.msra.mxu0 0
    %372 = vmatprep.subr.bf16.mxu0 0
    %373 = vmatpush1.bf16.msra.mxu0 0
    %374 = vmatprep.subr.bf16.mxu0 0
    %375 = vmatpush1.bf16.msra.mxu0 0
    %376 = vmatprep.subr.bf16.mxu0 0
    %377 = vmatpush1.bf16.msra.mxu0 0
    %378 = vmatprep.subr.bf16.mxu0 0
    %379 = vmatpush1.bf16.msra.mxu0 0
    %380 = vmatprep.subr.bf16.mxu0 0
    %381 = vmatpush1.bf16.msra.mxu0 0
    %382 = vmatprep.subr.bf16.mxu0 0
    %383 = vmatpush1.bf16.msra.mxu0 0
    %384 = vmatprep.subr.bf16.mxu0 0
    %385 = vmatpush1.bf16.msra.mxu0 0
    %386 = vmatprep.subr.bf16.mxu0 0
    %387 = vmatpush1.bf16.msra.mxu0 0
    %388 = vmatprep.subr.bf16.mxu0 0
    %389 = vmatpush1.bf16.msra.mxu0 0
    %390 = vmatprep.subr.bf16.mxu0 0
    %391 = vmatpush1.bf16.msra.mxu0 0
    %392 = vmatprep.subr.bf16.mxu0 0
    %393 = vmatpush1.bf16.msra.mxu0 0
    %394 = vmatprep.subr.bf16.mxu0 0
    %395 = vmatpush1.bf16.msra.mxu0 0
    %396 = vmatprep.mubr.bf16.mxu0 0
    %397 = vmatmul.mubr.bf16.gmra.mrb[0].mxu0 %v362
    %v398 = vpop.f32.mrb[0].mxu0
    %v399 = vadd.f32 0.0, %v398
    %v400 = vpop.f32.mrb[0].mxu0
    %v401 = vpop.f32.mrb[0].mxu0
    %v402 = vpop.f32.mrb[0].mxu0
    %403 = vdwg.mxu0
    %v404 = vadd.f32 %v152, %v399
    %v405 = vtanh.pop %v404
    %v406 = vpack.c.bf16 %v405, %v405
    %v408 = vsel %vm85, %v406, 0
    %410 = vmatprep.subr.bf16.mxu0 0
    %411 = vmatpush1.bf16.msra.mxu0 %v173
    %412 = vmatprep.subr.bf16.mxu0 0
    %413 = vmatpush1.bf16.msra.mxu0 %v174
    %414 = vmatprep.subr.bf16.mxu0 0
    %415 = vmatpush1.bf16.msra.mxu0 0
    %416 = vmatprep.subr.bf16.mxu0 0
    %417 = vmatpush1.bf16.msra.mxu0 0
    %418 = vmatprep.subr.bf16.mxu0 0
    %419 = vmatpush1.bf16.msra.mxu0 0
    %420 = vmatprep.subr.bf16.mxu0 0
    %421 = vmatpush1.bf16.msra.mxu0 0
    %422 = vmatprep.subr.bf16.mxu0 0
    %423 = vmatpush1.bf16.msra.mxu0 0
    %424 = vmatprep.subr.bf16.mxu0 0
    %425 = vmatpush1.bf16.msra.mxu0 0
    %426 = vmatprep.subr.bf16.mxu0 0
    %427 = vmatpush1.bf16.msra.mxu0 0
    %428 = vmatprep.subr.bf16.mxu0 0
    %429 = vmatpush1.bf16.msra.mxu0 0
    %430 = vmatprep.subr.bf16.mxu0 0
    %431 = vmatpush1.bf16.msra.mxu0 0
    %432 = vmatprep.subr.bf16.mxu0 0
    %433 = vmatpush1.bf16.msra.mxu0 0
    %434 = vmatprep.subr.bf16.mxu0 0
    %435 = vmatpush1.bf16.msra.mxu0 0
    %436 = vmatprep.subr.bf16.mxu0 0
    %437 = vmatpush1.bf16.msra.mxu0 0
    %438 = vmatprep.subr.bf16.mxu0 0
    %439 = vmatpush1.bf16.msra.mxu0 0
    %440 = vmatprep.subr.bf16.mxu0 0
    %441 = vmatpush1.bf16.msra.mxu0 0
    %442 = vmatprep.mubr.bf16.mxu0 0
    %443 = vmatmul.mubr.bf16.gmra.mrb[0].mxu0 %v408
    %v444 = vpop.f32.mrb[0].mxu0
    %v445 = vadd.f32 0.0, %v444
    %v446 = vpop.f32.mrb[0].mxu0
    %v447 = vpop.f32.mrb[0].mxu0
    %v448 = vpop.f32.mrb[0].mxu0
    %449 = vdwg.mxu0
    %v450 = vadd.f32 %v157, %v445
    %v451 = vtanh.pop %v450
    %v452 = vpack.c.bf16 %v451, %v451
    %v454 = vsel %vm85, %v452, 0
    %456 = vmatprep.subr.bf16.mxu0 0
    %457 = vmatpush1.bf16.msra.mxu0 %v173
    %458 = vmatprep.subr.bf16.mxu0 0
    %459 = vmatpush1.bf16.msra.mxu0 %v174
    %460 = vmatprep.subr.bf16.mxu0 0
    %461 = vmatpush1.bf16.msra.mxu0 0
    %462 = vmatprep.subr.bf16.mxu0 0
    %463 = vmatpush1.bf16.msra.mxu0 0
    %464 = vmatprep.subr.bf16.mxu0 0
    %465 = vmatpush1.bf16.msra.mxu0 0
    %466 = vmatprep.subr.bf16.mxu0 0
    %467 = vmatpush1.bf16.msra.mxu0 0
    %468 = vmatprep.subr.bf16.mxu0 0
    %469 = vmatpush1.bf16.msra.mxu0 0
    %470 = vmatprep.subr.bf16.mxu0 0
    %471 = vmatpush1.bf16.msra.mxu0 0
    %472 = vmatprep.subr.bf16.mxu0 0
    %473 = vmatpush1.bf16.msra.mxu0 0
    %474 = vmatprep.subr.bf16.mxu0 0
    %475 = vmatpush1.bf16.msra.mxu0 0
    %476 = vmatprep.subr.bf16.mxu0 0
    %477 = vmatpush1.bf16.msra.mxu0 0
    %478 = vmatprep.subr.bf16.mxu0 0
    %479 = vmatpush1.bf16.msra.mxu0 0
    %480 = vmatprep.subr.bf16.mxu0 0
    %481 = vmatpush1.bf16.msra.mxu0 0
    %482 = vmatprep.subr.bf16.mxu0 0
    %483 = vmatpush1.bf16.msra.mxu0 0
    %484 = vmatprep.subr.bf16.mxu0 0
    %485 = vmatpush1.bf16.msra.mxu0 0
    %486 = vmatprep.subr.bf16.mxu0 0
    %487 = vmatpush1.bf16.msra.mxu0 0
    %488 = vmatprep.mubr.bf16.mxu0 0
    %489 = vmatmul.mubr.bf16.gmra.mrb[0].mxu0 %v454
    %v490 = vpop.f32.mrb[0].mxu0
    %v491 = vadd.f32 0.0, %v490
    %v492 = vpop.f32.mrb[0].mxu0
    %v493 = vpop.f32.mrb[0].mxu0
    %v494 = vpop.f32.mrb[0].mxu0
    %495 = vdwg.mxu0
    %v496 = vadd.f32 %v160, %v491
    %v497 = vtanh.pop %v496
    %v498 = vpack.c.bf16 %v497, %v497
    %v500 = vlaneseq
    %v501 = vshrl.u32 %v500, 7
    %v502 = vsub.s32 0, %v501
    %v503 = vrot.slane %v33, %v502
    %v509 = vunpack.c.l.b16 %v29
    %v510 = vunpack.c.l.b16 %v30
    %v511 = vunpack.c.l.b16 %v31
    %v512 = vunpack.c.l.b16 %v32
    %v513 = vpack.c.b16 %v510, %v509
    %v514 = vpack.c.b16 %v512, %v511
    %v518 = vsel %vm85, %v498, 0
    %520 = vmatprep.subr.bf16.mxu0 0
    %521 = vmatpush1.bf16.msra.mxu0 %v513
    %522 = vmatprep.subr.bf16.mxu0 0
    %523 = vmatpush1.bf16.msra.mxu0 %v514
    %524 = vmatprep.subr.bf16.mxu0 0
    %525 = vmatpush1.bf16.msra.mxu0 0
    %526 = vmatprep.subr.bf16.mxu0 0
    %527 = vmatpush1.bf16.msra.mxu0 0
    %528 = vmatprep.subr.bf16.mxu0 0
    %529 = vmatpush1.bf16.msra.mxu0 0
    %530 = vmatprep.subr.bf16.mxu0 0
    %531 = vmatpush1.bf16.msra.mxu0 0
    %532 = vmatprep.subr.bf16.mxu0 0
    %533 = vmatpush1.bf16.msra.mxu0 0
    %534 = vmatprep.subr.bf16.mxu0 0
    %535 = vmatpush1.bf16.msra.mxu0 0
    %536 = vmatprep.subr.bf16.mxu0 0
    %537 = vmatpush1.bf16.msra.mxu0 0
    %538 = vmatprep.subr.bf16.mxu0 0
    %539 = vmatpush1.bf16.msra.mxu0 0
    %540 = vmatprep.subr.bf16.mxu0 0
    %541 = vmatpush1.bf16.msra.mxu0 0
    %542 = vmatprep.subr.bf16.mxu0 0
    %543 = vmatpush1.bf16.msra.mxu0 0
    %544 = vmatprep.subr.bf16.mxu0 0
    %545 = vmatpush1.bf16.msra.mxu0 0
    %546 = vmatprep.subr.bf16.mxu0 0
    %547 = vmatpush1.bf16.msra.mxu0 0
    %548 = vmatprep.subr.bf16.mxu0 0
    %549 = vmatpush1.bf16.msra.mxu0 0
    %550 = vmatprep.subr.bf16.mxu0 0
    %551 = vmatpush1.bf16.msra.mxu0 0
    %552 = vmatprep.mubr.bf16.mxu0 0
    %553 = vmatmul.mubr.bf16.gmra.mrb[0].mxu0 %v518
    %v554 = vpop.f32.mrb[0].mxu0
    %v555 = vadd.f32 %v503, %v554
    %v556 = vpop.f32.mrb[0].mxu0
    %v557 = vpop.f32.mrb[0].mxu0
    %v558 = vpop.f32.mrb[0].mxu0
    %559 = vdwg.mxu0
    %560 = vst [vmem:[#allocation2] sm:$0xff] %v555
    // Predicated region
    $region26: #{tpu_custom_call.1} parent=1 // pred_check
      _
    $region27: #{tpu_custom_call.1} parent=1 // pred_check_branch
      %562 = sbr.rel (0) target = $region29
    $region28: #{tpu_custom_call.1} parent=1 // pred_region
      %s564 = ssub.s32 128, 128
      %565 = vsyncadd [#allocation3], %s564
      %s567 = sshll.u32 [#allocation2], 4
      %s568 = int_to_ptr.vmem [resolvable:$true] %s567
      %570 = dma.vmem_to_hbm [thread:$0]  %s568, 128, %s6, [#allocation3]
    $region29: #{tpu_custom_call.1} parent=1 // pred_fallthru
      _
    // Predicated region
    $region30: #{tpu_custom_call.1} parent=1 // pred_check
      _
    $region31: #{tpu_custom_call.1} parent=1 // pred_check_branch
      %572 = sbr.rel (0) target = $region33
    $region32: #{tpu_custom_call.1} parent=1 // pred_region
      %573 = dma.done [#allocation3], 128
    $region33: #{tpu_custom_call.1} parent=1 // pred_fallthru
      _
    %574 = vsyncpa [#allocation3], 1

</llo_original>
